<compile_context>
chip_gen: v5e
topology: v5e:2x2
jax: 0.10.0
libtpu: 0.0.40
codegen_flags: <defaults>
</compile_context>

<pallas_src>
import jax
import jax.numpy as jnp
from jax.experimental import pallas as pl
from jax.experimental.pallas import tpu as pltpu

EPS = 1e-8
LANE = 128


def _round_up(x, m):
    return (x + m - 1) // m * m


def _vmem_budget_bytes():
    """(physical VMEM, scoped budget = 75% of it).  Falls back to v7x's 64 MiB."""
    cap = 64 * 2 ** 20
    try:
        info_cap = int(pltpu.get_tpu_info().vmem_capacity_bytes)
        if info_cap > 0:
            cap = info_cap
    except Exception:
        pass
    return cap, (cap * 3) // 4


def _pick_batch_tile(B, S, D, budget):
    """Largest divisor bt of B such that:
         * per-row VMEM cost (fp32 x double-buffered + fp32 temporaries of the
           RMS/Linear1 branch + bf16 hidden scratch) stays under ~40% of budget,
         * B // bt >= 2 when B >= 2 (keep both v7x TensorCores busy),
         * (bt*S) % 8 == 0 or bt == B (sublane-aligned 2D output block)."""
    per_row = D * (2 * 4 + 3 * 4 + 2)
    max_rows = max(S, (budget * 2 // 5) // max(per_row, 1))
    max_rows = min(max_rows, 4096)

    divisors = [d for d in range(1, B + 1) if B % d == 0]

    def row_ok(bt):
        return (bt * S) % 8 == 0 or bt == B

    cands = [bt for bt in divisors
             if bt * S <= max_rows and row_ok(bt) and (B < 2 or B // bt >= 2)]
    if not cands:
        cands = [bt for bt in divisors if bt * S <= max_rows and row_ok(bt)]
    if cands:
        return max(cands)
    return min(bt for bt in divisors if row_ok(bt))   # bt == B always qualifies


def _pick_vocab_tile(rows, S, D, V, out_bytes, budget):
    """Vocab tile tn (multiple of 256 when possible, for MXU N utilization) and
    padded vocab size, sized so double-buffered W2/out tiles fit the budget."""
    fixed = rows * D * (2 * 4 + 3 * 4 + 2)        # x bufs + fp32 temps + bf16 scratch
    fixed += S * D * 4 + D * D * 2 + D * 4        # rms scale, W1, b1 (single-buffered)
    rem = max(budget - fixed, LANE)
    per_tn = 2 * D * 2 + rows * (2 * out_bytes + 4) + 2 * 4
    #        W2 x2 bf16   out x2 + fp32 logits temp      b2 x2
    tn_cap = max(LANE, rem // max(per_tn, 1))

    if V <= LANE:                                  # tiny vocab: single unpadded tile
        return V, V
    v_full = _round_up(V, LANE)
    if tn_cap >= v_full:                           # whole (padded) vocab in one tile
        return v_full, v_full
    tn = int(min(tn_cap, 2048))
    tn = (tn // 256) * 256 if tn >= 256 else max(LANE, (tn // LANE) * LANE)
    return tn, _round_up(V, tn)


def _rms_mlp_kernel(x_ref, scale_ref, w1_ref, b1_ref, w2_ref, b2_ref,
                    out_ref, h_ref):
    """One grid step = (batch tile bi, vocab tile j).

    x_ref:     (Bt, S, D)   f32   embedded activations (batch tile)
    scale_ref: (S, D)       f32   RMSNorm learned scale      (grid-invariant)
    w1_ref:    (D, D)       bf16  Linear1 weight (in, out)   (grid-invariant)
    b1_ref:    (1, D)       f32                              (grid-invariant)
    w2_ref:    (D, tn)      bf16  Linear2 weight, vocab tile
    b2_ref:    (1, tn)      f32   vocab tile
    out_ref:   (Bt*S, tn)         logits tile (lane/sublane dense 2D store)
    h_ref:     (Bt*S, D)    bf16  scratch: post-ReLU hidden, reused across vocab tiles
    """
    j = pl.program_id(1)

    @pl.when(j == 0)
    def _compute_hidden():
        x = x_ref[...]                                       # (Bt, S, D) fp32
        bt, s, d = x.shape
        # Per-batch-element RMS over the whole (S, D) slab (two single-axis reduces).
        sq = jnp.sum(x * x, axis=-1, keepdims=True)          # (Bt, S, 1)
        ms = jnp.sum(sq, axis=1, keepdims=True) / (s * d)    # (Bt, 1, 1)
        inv_rms = jax.lax.rsqrt(ms + EPS)
        xn = x * inv_rms * scale_ref[...][None, :, :]        # (Bt, S, D) fp32
        # Fuse batch rows into the MXU M dimension; cast to bf16 only at the MXU.
        xn2 = xn.reshape(bt * s, d).astype(jnp.bfloat16)
        h = jnp.dot(xn2, w1_ref[...], preferred_element_type=jnp.float32)
        h = jnp.maximum(h + b1_ref[...], 0.0)                # bias + ReLU in fp32
        h_ref[...] = h.astype(jnp.bfloat16)

    logits = jnp.dot(h_ref[...], w2_ref[...], preferred_element_type=jnp.float32)
    out_ref[...] = (logits + b2_ref[...]).astype(out_ref.dtype)


def simple_model_rms_forward(idx, emb_table, rms_scale, w1, b1, w2, b2,
                             out_dtype=jnp.float32):
    """Forward pass. idx: (B, S) int32 token ids. Returns logits (B, S, V)."""
    B, S = idx.shape
    V, D = emb_table.shape
    assert rms_scale.shape == (S, D)
    assert w1.shape == (D, D) and b1.shape == (D,)
    assert w2.shape == (D, V) and b2.shape == (V,)

    # Embedding lookup: gather fp32 rows only (no per-call bf16 copy of the whole
    # table); RMS statistics are computed in fp32 inside the kernel.
    # TODO(synk): fuse the gather into the kernel (scalar-prefetch idx + per-row
    # DMA gather into VMEM) to remove the (B,S,D) activation HBM round trip.
    x = jnp.take(emb_table, idx, axis=0).astype(jnp.float32)   # (B, S, D) fp32

    scale_f32 = rms_scale.astype(jnp.float32)
    w1_bf = w1.astype(jnp.bfloat16)
    w2_bf = w2.astype(jnp.bfloat16)
    b1_2d = b1.reshape(1, D).astype(jnp.float32)

    out_bytes = jnp.dtype(out_dtype).itemsize
    cap, budget = _vmem_budget_bytes()
    bt = _pick_batch_tile(B, S, D, budget)
    rows = bt * S
    tn, v_pad = _pick_vocab_tile(rows, S, D, V, out_bytes, budget)

    if v_pad != V:
        w2_bf = jnp.pad(w2_bf, ((0, 0), (0, v_pad - V)))
        b2_f = jnp.pad(b2.astype(jnp.float32), (0, v_pad - V))
    else:
        b2_f = b2.astype(jnp.float32)
    b2_2d = b2_f.reshape(1, v_pad)

    grid = (B // bt, v_pad // tn)

    grid_spec = pltpu.PrefetchScalarGridSpec(
        num_scalar_prefetch=0,
        grid=grid,
        in_specs=[
            pl.BlockSpec((bt, S, D), lambda bi, j: (bi, 0, 0)),          # x
            pl.BlockSpec((S, D), lambda bi, j: (0, 0),
                         pipeline_mode=pl.Buffered(1)),                  # rms scale
            pl.BlockSpec((D, D), lambda bi, j: (0, 0),
                         pipeline_mode=pl.Buffered(1)),                  # W1
            pl.BlockSpec((1, D), lambda bi, j: (0, 0),
                         pipeline_mode=pl.Buffered(1)),                  # b1
            pl.BlockSpec((D, tn), lambda bi, j: (0, j)),                 # W2 tile
            pl.BlockSpec((1, tn), lambda bi, j: (0, j)),                 # b2 tile
        ],
        out_specs=pl.BlockSpec((rows, tn), lambda bi, j: (bi, j)),       # 2D, lane-dense
        scratch_shapes=[pltpu.VMEM((rows, D), jnp.bfloat16)],
    )

    logits2d = pl.pallas_call(
        _rms_mlp_kernel,
        out_shape=jax.ShapeDtypeStruct((B * S, v_pad), out_dtype),
        grid_spec=grid_spec,
        compiler_params=pltpu.CompilerParams(
            dimension_semantics=("parallel", "arbitrary"),
            vmem_limit_bytes=int(budget),
        ),
    )(x, scale_f32, w1_bf, b1_2d, w2_bf, b2_2d)

    if v_pad != V:
        logits2d = logits2d[:, :V]
    return logits2d.reshape(B, S, V)


def init_params(key, vocab_size, d_model, context_window):
    """Deterministic parameter init mirroring PyTorch defaults (shapes only)."""
    k_emb, k_w1, k_b1, k_w2, k_b2 = jax.random.split(key, 5)
    emb = jax.random.normal(k_emb, (vocab_size, d_model), jnp.float32)
    rms_scale = jnp.ones((context_window, d_model), jnp.float32)
    lim1 = 1.0 / (d_model ** 0.5)
    # Stored as (in, out) = PyTorch weight.T
    w1 = jax.random.uniform(k_w1, (d_model, d_model), jnp.float32, -lim1, lim1)
    b1 = jax.random.uniform(k_b1, (d_model,), jnp.float32, -lim1, lim1)
    w2 = jax.random.uniform(k_w2, (d_model, vocab_size), jnp.float32, -lim1, lim1)
    b2 = jax.random.uniform(k_b2, (vocab_size,), jnp.float32, -lim1, lim1)
    return emb, rms_scale, w1, b1, w2, b2


if __name__ == "__main__":
    config = dict(vocab_size=64, d_model=32, context_window=8)
    B = 2

    key = jax.random.PRNGKey(0)
    k_params, k_idx = jax.random.split(key)
    emb, rms_scale, w1, b1, w2, b2 = init_params(
        k_params, config["vocab_size"], config["d_model"], config["context_window"])

    idx = jax.random.randint(
        k_idx, (B, config["context_window"]), 0, config["vocab_size"], dtype=jnp.int32)

    logits = simple_model_rms_forward(idx, emb, rms_scale, w1, b1, w2, b2)
    jax.block_until_ready(logits)

    assert logits.shape == (B, config["context_window"], config["vocab_size"])
    assert logits.dtype == jnp.float32
    assert bool(jnp.all(jnp.isfinite(logits)))
    # TODO(synk): cross-entropy loss branch (targets is not None) not implemented;
    # a flash-softmax style online logsumexp across vocab tiles would avoid the
    # full logits writeback entirely for the training path.
    print("KERNEL_OK")
</pallas_src>

<mosaic_0001>
module attributes {stable_mosaic.version = 11 : i64} {
  func.func @_rms_mlp_kernel(%arg0: i32, %arg1: i32, %arg2: memref<1x8x32xf32, #tpu.memory_space<vmem>>, %arg3: memref<8x32xf32, #tpu.memory_space<vmem>>, %arg4: memref<32x32xbf16, #tpu.memory_space<vmem>>, %arg5: memref<1x32xf32, #tpu.memory_space<vmem>>, %arg6: memref<32x64xbf16, #tpu.memory_space<vmem>>, %arg7: memref<1x64xf32, #tpu.memory_space<vmem>>, %arg8: memref<8x64xf32, #tpu.memory_space<vmem>>, %arg9: memref<8x32xbf16, #tpu.memory_space<vmem>>) attributes {dimension_semantics = [#tpu.dimension_semantics<parallel>, #tpu.dimension_semantics<arbitrary>], iteration_bounds = array<i64: 2, 1>, scalar_prefetch = 0 : i64, scratch_operands = 1 : i64, tpu.core_type = #tpu.core_type<tc>, window_params = [{transform_indices = @transform_0, window_bounds = array<i64: 1, 8, 32>}, {pipeline_mode = #tpu.pipeline_mode<synchronous>, transform_indices = @transform_1, window_bounds = array<i64: 8, 32>}, {pipeline_mode = #tpu.pipeline_mode<synchronous>, transform_indices = @transform_2, window_bounds = array<i64: 32, 32>}, {pipeline_mode = #tpu.pipeline_mode<synchronous>, transform_indices = @transform_3, window_bounds = array<i64: 1, 32>}, {transform_indices = @transform_4, window_bounds = array<i64: 32, 64>}, {transform_indices = @transform_5, window_bounds = array<i64: 1, 64>}, {transform_indices = @transform_6, window_bounds = array<i64: 8, 64>}]} {
    %c0_i32 = arith.constant 0 : i32
    %0 = arith.cmpi eq, %arg1, %c0_i32 : i32
    %1 = arith.extui %0 : i1 to i32
    %c0_i32_0 = arith.constant 0 : i32
    %2 = arith.cmpi ne, %1, %c0_i32_0 : i32
    scf.if %2 {
      %c0_8 = arith.constant 0 : index
      %c0_9 = arith.constant 0 : index
      %c0_10 = arith.constant 0 : index
      %10 = vector.load %arg2[%c0_8, %c0_9, %c0_10] : memref<1x8x32xf32, #tpu.memory_space<vmem>>, vector<1x8x32xf32>
      %11 = arith.mulf %10, %10 : vector<1x8x32xf32>
      %cst_11 = arith.constant dense<0.000000e+00> : vector<1x8xf32>
      %12 = vector.multi_reduction <add>, %11, %cst_11 [2] : vector<1x8x32xf32> to vector<1x8xf32>
      %13 = vector.shape_cast %12 : vector<1x8xf32> to vector<1x8x1xf32>
      %cst_12 = arith.constant dense<0.000000e+00> : vector<1x1xf32>
      %14 = vector.multi_reduction <add>, %13, %cst_12 [1] : vector<1x8x1xf32> to vector<1x1xf32>
      %15 = vector.shape_cast %14 : vector<1x1xf32> to vector<1x1x1xf32>
      %cst_13 = arith.constant 2.560000e+02 : f32
      %16 = vector.broadcast %cst_13 : f32 to vector<1x1x1xf32>
      %17 = arith.divf %15, %16 : vector<1x1x1xf32>
      %cst_14 = arith.constant 9.99999993E-9 : f32
      %18 = vector.broadcast %cst_14 : f32 to vector<1x1x1xf32>
      %19 = arith.addf %17, %18 : vector<1x1x1xf32>
      %20 = math.rsqrt %19 : vector<1x1x1xf32>
      %21 = vector.broadcast %20 : vector<1x1x1xf32> to vector<1x8x32xf32>
      %22 = arith.mulf %10, %21 : vector<1x8x32xf32>
      %c0_15 = arith.constant 0 : index
      %c0_16 = arith.constant 0 : index
      %23 = vector.load %arg3[%c0_15, %c0_16] : memref<8x32xf32, #tpu.memory_space<vmem>>, vector<8x32xf32>
      %24 = vector.shape_cast %23 : vector<8x32xf32> to vector<1x8x32xf32>
      %25 = arith.mulf %22, %24 : vector<1x8x32xf32>
      %26 = vector.shape_cast %25 : vector<1x8x32xf32> to vector<8x32xf32>
      %27 = arith.truncf %26 : vector<8x32xf32> to vector<8x32xbf16>
      %c0_17 = arith.constant 0 : index
      %c0_18 = arith.constant 0 : index
      %28 = vector.load %arg4[%c0_17, %c0_18] : memref<32x32xbf16, #tpu.memory_space<vmem>>, vector<32x32xbf16>
      %cst_19 = arith.constant dense<0.000000e+00> : vector<8x32xf32>
      %29 = tpu.matmul %27, %28, %cst_19 {dimension_numbers = #tpu.dot_dimension_numbers<[1], [0], [0], [1], [0, 0, 1, 1], [], []>} : vector<8x32xbf16>, vector<32x32xbf16>, vector<8x32xf32> -> vector<8x32xf32>
      %c0_20 = arith.constant 0 : index
      %c0_21 = arith.constant 0 : index
      %30 = vector.load %arg5[%c0_20, %c0_21] : memref<1x32xf32, #tpu.memory_space<vmem>>, vector<1x32xf32>
      %31 = vector.broadcast %30 : vector<1x32xf32> to vector<8x32xf32>
      %32 = arith.addf %29, %31 : vector<8x32xf32>
      %cst_22 = arith.constant 0.000000e+00 : f32
      %33 = vector.broadcast %cst_22 : f32 to vector<8x32xf32>
      %34 = arith.maximumf %32, %33 : vector<8x32xf32>
      %35 = arith.truncf %34 : vector<8x32xf32> to vector<8x32xbf16>
      %c0_23 = arith.constant 0 : index
      %c0_24 = arith.constant 0 : index
      %36 = vector.load %arg9[%c0_23, %c0_24] : memref<8x32xbf16, #tpu.memory_space<vmem>>, vector<8x32xbf16>
      tpu.vector_store %arg9[%c0_23, %c0_24], %35 {strides = array<i32>} : memref<8x32xbf16, #tpu.memory_space<vmem>>, vector<8x32xbf16>,
    } else {
    }
    %c0 = arith.constant 0 : index
    %c0_1 = arith.constant 0 : index
    %3 = vector.load %arg9[%c0, %c0_1] : memref<8x32xbf16, #tpu.memory_space<vmem>>, vector<8x32xbf16>
    %c0_2 = arith.constant 0 : index
    %c0_3 = arith.constant 0 : index
    %4 = vector.load %arg6[%c0_2, %c0_3] : memref<32x64xbf16, #tpu.memory_space<vmem>>, vector<32x64xbf16>
    %cst = arith.constant dense<0.000000e+00> : vector<8x64xf32>
    %5 = tpu.matmul %3, %4, %cst {dimension_numbers = #tpu.dot_dimension_numbers<[1], [0], [0], [1], [0, 0, 1, 1], [], []>} : vector<8x32xbf16>, vector<32x64xbf16>, vector<8x64xf32> -> vector<8x64xf32>
    %c0_4 = arith.constant 0 : index
    %c0_5 = arith.constant 0 : index
    %6 = vector.load %arg7[%c0_4, %c0_5] : memref<1x64xf32, #tpu.memory_space<vmem>>, vector<1x64xf32>
    %7 = vector.broadcast %6 : vector<1x64xf32> to vector<8x64xf32>
    %8 = arith.addf %5, %7 : vector<8x64xf32>
    %c0_6 = arith.constant 0 : index
    %c0_7 = arith.constant 0 : index
    %9 = vector.load %arg8[%c0_6, %c0_7] : memref<8x64xf32, #tpu.memory_space<vmem>>, vector<8x64xf32>
    tpu.vector_store %arg8[%c0_6, %c0_7], %8 {strides = array<i32>} : memref<8x64xf32, #tpu.memory_space<vmem>>, vector<8x64xf32>,
    return
  }
  func.func @transform_0(%arg0: i32, %arg1: i32) -> (i32, i32, i32) {
    %c0_i32 = arith.constant 0 : i32
    %c0_i32_0 = arith.constant 0 : i32
    %c0_i32_1 = arith.constant 0 : i32
    return %arg0, %c0_i32, %c0_i32_0 : i32, i32, i32
  }
  func.func @transform_1(%arg0: i32, %arg1: i32) -> (i32, i32) {
    %c0_i32 = arith.constant 0 : i32
    %c0_i32_0 = arith.constant 0 : i32
    %c0_i32_1 = arith.constant 0 : i32
    return %c0_i32, %c0_i32_0 : i32, i32
  }
  func.func @transform_2(%arg0: i32, %arg1: i32) -> (i32, i32) {
    %c0_i32 = arith.constant 0 : i32
    %c0_i32_0 = arith.constant 0 : i32
    %c0_i32_1 = arith.constant 0 : i32
    return %c0_i32, %c0_i32_0 : i32, i32
  }
  func.func @transform_3(%arg0: i32, %arg1: i32) -> (i32, i32) {
    %c0_i32 = arith.constant 0 : i32
    %c0_i32_0 = arith.constant 0 : i32
    %c0_i32_1 = arith.constant 0 : i32
    return %c0_i32, %c0_i32_0 : i32, i32
  }
  func.func @transform_4(%arg0: i32, %arg1: i32) -> (i32, i32) {
    %c0_i32 = arith.constant 0 : i32
    %c0_i32_0 = arith.constant 0 : i32
    return %c0_i32, %arg1 : i32, i32
  }
  func.func @transform_5(%arg0: i32, %arg1: i32) -> (i32, i32) {
    %c0_i32 = arith.constant 0 : i32
    %c0_i32_0 = arith.constant 0 : i32
    return %c0_i32, %arg1 : i32, i32
  }
  func.func @transform_6(%arg0: i32, %arg1: i32) -> (i32, i32) {
    %c0_i32 = arith.constant 0 : i32
    return %arg0, %arg1 : i32, i32
  }
}

</mosaic_0001>

<llo_original>
// kernel: tpu_custom_call.1
$region0: #{tpu_custom_call.1}
  #allocation0 [shape = 'u32[]', space=smem, size = 0x4, offset = 0x4, fixed_abs, tag = 'smem constant byte address 0x4 - core index']
  #allocation1 [shape = 'u32[72,128]{1,0:T(1,128)}', space=vmem, size = 0x9000, scoped, tag = 'internal scratch']
  #allocation2 [shape = 'bf16[8,32]{1,0:T(8,128)(2,1)}', space=vmem, size = 0x800, scoped, tag = 'scratch operand']
  %s0 = inlined_call_operand.hbm [shape: f32[2,8,32], index: 0, kind: input, shape index: {}]
  %s1 = inlined_call_operand.hbm [shape: f32[8,32], index: 1, kind: input, shape index: {}]
  %s2 = inlined_call_operand.hbm [shape: bf16[32,32], index: 2, kind: input, shape index: {}]
  %s3 = inlined_call_operand.vmem [shape: f32[1,32], index: 3, kind: input, shape index: {}]
  %s4 = inlined_call_operand.hbm [shape: bf16[32,64], index: 4, kind: input, shape index: {}]
  %s5 = inlined_call_operand.vmem [shape: f32[1,64], index: 5, kind: input, shape index: {}]
  %s6 = inlined_call_operand.hbm [shape: f32[16,64], index: 6, kind: output, shape index: {}]
  %s7 = sld [smem:[#allocation0]]
  $region77: #{tpu_custom_call.1} parent=0
    _
  %s9 = ssub.s32 1, %s7
  %s10 = scalar_select 0, %s9, %s7
  $region1: #{tpu_custom_call.1} parent=0
    #allocation3 [shape = 'u8[8192]{0}', space=vmem, size = 0x2000, scoped, tag = 'input window, operand 0']
    #allocation4 [shape = 's32[2]{0}', space=sflag, size = 0x8, scoped, tag = 'scoped memory for tpu_custom_call.1']
    #allocation5 [shape = 's32[2]{0}', space=sflag, size = 0x8, scoped, tag = 'scoped memory for tpu_custom_call.1']
    #allocation6 [shape = 'u8[4096]{0}', space=vmem, size = 0x1000, scoped, tag = 'input window, operand 1, single buffered']
    #allocation7 [shape = 's32[1]{0}', space=sflag, size = 0x4, scoped, tag = 'scoped memory for tpu_custom_call.1']
    #allocation8 [shape = 'u8[8192]{0}', space=vmem, size = 0x2000, scoped, tag = 'input window, operand 2, single buffered']
    #allocation9 [shape = 'u8[8192]{0}', space=vmem, size = 0x2000, scoped, tag = 'input window, operand 4, single buffered']
    #allocation10 [shape = 's32[1]{0}', space=sflag, size = 0x4, scoped, tag = 'scoped memory for tpu_custom_call.1']
    #allocation11 [shape = 'u8[8192]{0}', space=vmem, size = 0x2000, scoped, tag = 'output window, operand 0']
    %11 = vsyncpa [#allocation4], 0
    %s12 = scalar_lea.sflag [#allocation4], 1
    %13 = vsyncpa %s12, 0
    %14 = vsyncpa [#allocation7], 0
    %15 = vsyncpa [#allocation10], 0
    %16 = vsyncpa [#allocation5], 0
    %s17 = scalar_lea.sflag [#allocation5], 1
    %18 = vsyncpa %s17, 0
    loop: start=0, step=1, limit=4
    $region2: #{tpu_custom_call.1} parent=1 // loop_pre_header
      _
    $region3: #{tpu_custom_call.1} parent=1 // loop_header
      %s20 = sphi 0, %s24
      %p21 = scmp.ge.s32.totalorder %s20, 4
      %s27 = sphi 0, %s39
      %s28 = sphi 0, %s35
      %s29 = sphi 0, %s27
      %s30 = sphi 0, %s28
      %s31 = sphi 0, %s29
      %s32 = sphi 0, %s30
      %s42 = sphi 0, %s44
      %s45 = sphi 0, %s42
      %s46 = sphi 0, %s45
      %s62 = sphi 0, %s46
      %s66 = sphi 0, %s66
      %s68 = sphi 0, %s66
      %s69 = sphi 0, %s68
      %s83 = sphi 0, %s69
      %s87 = sphi 0, %s87
      %s89 = sphi 0, %s87
      %s90 = sphi 0, %s89
      %s104 = sphi 0, %s90
      %s108 = sphi 0, %s108
      %s110 = sphi 0, %s108
      %s111 = sphi 0, %s110
      %s125 = sphi 0, %s111
      %s131 = sphi 0, %s133
      %s134 = sphi 0, %s131
      %s135 = sphi 0, %s134
      %s151 = sphi 0, %s135
      %s157 = sphi 0, %s159
      %s160 = sphi 0, %s157
      %s161 = sphi 0, %s160
      %s177 = sphi 0, %s161
      %s185 = sphi 0, %s187
      %s188 = sphi 0, %s185
      %s189 = sphi 0, %s188
      %s205 = sphi 0, %s189
    $region4: #{tpu_custom_call.1} parent=1 // loop_header_branch
      %23 = sbr.rel (%p21) target = $region8
    $region5: #{tpu_custom_call.1} parent=1 // loop_body
      %s25 = ssub.s32 %s20, 1
      %s26 = ssub.s32 %s20, 2
      %s33 = sadd.s32 1, %s28
      %p34 = scmp.ge.s32.totalorder %s33, 1
      %s35 = scalar_select %p34, 0, %s33
      %s36 = sadd.s32 1, %s27
      %s37 = scalar_select %p34, %s36, %s27
      %p38 = scmp.ge.s32.totalorder %s37, 2
      %s39 = scalar_select %p38, 0, %s37
      %s40 = ssub.s32 %s27, %s39
      %p41 = scmp.eq.s32.totalorder %s40, 0
      %s43 = sadd.s32 %s42, 1
      %s44 = scalar_select %p41, %s42, %s43
      %p47 = pneg %p41
      %p48 = scmp.eq.s32.totalorder %s20, 1
      %p49 = por %p47, %p48
      %p50 = scmp.ne.s32.totalorder %s42, %s45
      %p51 = scmp.eq.s32.totalorder %s20, 0
      %p52 = por %p50, %p51
      %p53 = scmp.ne.s32.totalorder %s42, %s45
      %p54 = scmp.eq.s32.totalorder %s25, 1
      %p55 = por %p53, %p54
      %p56 = scmp.ne.s32.totalorder %s45, %s46
      %p57 = scmp.eq.s32.totalorder %s25, 0
      %p58 = por %p56, %p57
      %p59 = scmp.ne.s32.totalorder %s45, %s46
      %p60 = scmp.eq.s32.totalorder %s26, 1
      %p61 = por %p59, %p60
      %p63 = scmp.ne.s32.totalorder %s46, %s62
      %p64 = scmp.eq.s32.totalorder %s26, 0
      %p65 = por %p63, %p64
      %s67 = sadd.s32 %s66, 1
      %p70 = scmp.eq.s32.totalorder %s20, 1
      %p71 = scmp.ne.s32.totalorder %s66, %s68
      %p72 = scmp.eq.s32.totalorder %s20, 0
      %p73 = por %p71, %p72
      %p74 = scmp.ne.s32.totalorder %s66, %s68
      %p75 = scmp.eq.s32.totalorder %s25, 1
      %p76 = por %p74, %p75
      %p77 = scmp.ne.s32.totalorder %s68, %s69
      %p78 = scmp.eq.s32.totalorder %s25, 0
      %p79 = por %p77, %p78
      %p80 = scmp.ne.s32.totalorder %s68, %s69
      %p81 = scmp.eq.s32.totalorder %s26, 1
      %p82 = por %p80, %p81
      %p84 = scmp.ne.s32.totalorder %s69, %s83
      %p85 = scmp.eq.s32.totalorder %s26, 0
      %p86 = por %p84, %p85
      %s88 = sadd.s32 %s87, 1
      %p91 = scmp.eq.s32.totalorder %s20, 1
      %p92 = scmp.ne.s32.totalorder %s87, %s89
      %p93 = scmp.eq.s32.totalorder %s20, 0
      %p94 = por %p92, %p93
      %p95 = scmp.ne.s32.totalorder %s87, %s89
      %p96 = scmp.eq.s32.totalorder %s25, 1
      %p97 = por %p95, %p96
      %p98 = scmp.ne.s32.totalorder %s89, %s90
      %p99 = scmp.eq.s32.totalorder %s25, 0
      %p100 = por %p98, %p99
      %p101 = scmp.ne.s32.totalorder %s89, %s90
      %p102 = scmp.eq.s32.totalorder %s26, 1
      %p103 = por %p101, %p102
      %p105 = scmp.ne.s32.totalorder %s90, %s104
      %p106 = scmp.eq.s32.totalorder %s26, 0
      %p107 = por %p105, %p106
      %s109 = sadd.s32 %s108, 1
      %p112 = scmp.eq.s32.totalorder %s20, 1
      %p113 = scmp.ne.s32.totalorder %s108, %s110
      %p114 = scmp.eq.s32.totalorder %s20, 0
      %p115 = por %p113, %p114
      %p116 = scmp.ne.s32.totalorder %s108, %s110
      %p117 = scmp.eq.s32.totalorder %s25, 1
      %p118 = por %p116, %p117
      %p119 = scmp.ne.s32.totalorder %s110, %s111
      %p120 = scmp.eq.s32.totalorder %s25, 0
      %p121 = por %p119, %p120
      %p122 = scmp.ne.s32.totalorder %s110, %s111
      %p123 = scmp.eq.s32.totalorder %s26, 1
      %p124 = por %p122, %p123
      %p126 = scmp.ne.s32.totalorder %s111, %s125
      %p127 = scmp.eq.s32.totalorder %s26, 0
      %p128 = por %p126, %p127
      %s129 = ssub.s32 %s28, %s35
      %p130 = scmp.eq.s32.totalorder %s129, 0
      %s132 = sadd.s32 %s131, 1
      %s133 = scalar_select %p130, %s131, %s132
      %p136 = pneg %p130
      %p137 = scmp.eq.s32.totalorder %s20, 1
      %p138 = por %p136, %p137
      %p139 = scmp.ne.s32.totalorder %s131, %s134
      %p140 = scmp.eq.s32.totalorder %s20, 0
      %p141 = por %p139, %p140
      %p142 = scmp.ne.s32.totalorder %s131, %s134
      %p143 = scmp.eq.s32.totalorder %s25, 1
      %p144 = por %p142, %p143
      %p145 = scmp.ne.s32.totalorder %s134, %s135
      %p146 = scmp.eq.s32.totalorder %s25, 0
      %p147 = por %p145, %p146
      %p148 = scmp.ne.s32.totalorder %s134, %s135
      %p149 = scmp.eq.s32.totalorder %s26, 1
      %p150 = por %p148, %p149
      %p152 = scmp.ne.s32.totalorder %s135, %s151
      %p153 = scmp.eq.s32.totalorder %s26, 0
      %p154 = por %p152, %p153
      %s155 = ssub.s32 %s28, %s35
      %p156 = scmp.eq.s32.totalorder %s155, 0
      %s158 = sadd.s32 %s157, 1
      %s159 = scalar_select %p156, %s157, %s158
      %p162 = pneg %p156
      %p163 = scmp.eq.s32.totalorder %s20, 1
      %p164 = por %p162, %p163
      %p165 = scmp.ne.s32.totalorder %s157, %s160
      %p166 = scmp.eq.s32.totalorder %s20, 0
      %p167 = por %p165, %p166
      %p168 = scmp.ne.s32.totalorder %s157, %s160
      %p169 = scmp.eq.s32.totalorder %s25, 1
      %p170 = por %p168, %p169
      %p171 = scmp.ne.s32.totalorder %s160, %s161
      %p172 = scmp.eq.s32.totalorder %s25, 0
      %p173 = por %p171, %p172
      %p174 = scmp.ne.s32.totalorder %s160, %s161
      %p175 = scmp.eq.s32.totalorder %s26, 1
      %p176 = por %p174, %p175
      %p178 = scmp.ne.s32.totalorder %s161, %s177
      %p179 = scmp.eq.s32.totalorder %s26, 0
      %p180 = por %p178, %p179
      %s181 = ssub.s32 %s27, %s39
      %s182 = ssub.s32 %s28, %s35
      %s183 = sor.u32 %s181, %s182
      %p184 = scmp.eq.s32.totalorder %s183, 0
      %s186 = sadd.s32 %s185, 1
      %s187 = scalar_select %p184, %s185, %s186
      %p190 = pneg %p184
      %p191 = scmp.eq.s32.totalorder %s20, 1
      %p192 = por %p190, %p191
      %p193 = scmp.ne.s32.totalorder %s185, %s188
      %p194 = scmp.eq.s32.totalorder %s20, 0
      %p195 = por %p193, %p194
      %p196 = scmp.ne.s32.totalorder %s185, %s188
      %p197 = scmp.eq.s32.totalorder %s25, 1
      %p198 = por %p196, %p197
      %p199 = scmp.ne.s32.totalorder %s188, %s189
      %p200 = scmp.eq.s32.totalorder %s25, 0
      %p201 = por %p199, %p200
      %p202 = scmp.ne.s32.totalorder %s188, %s189
      %p203 = scmp.eq.s32.totalorder %s26, 1
      %p204 = por %p202, %p203
      %p206 = scmp.ne.s32.totalorder %s189, %s205
      %p207 = scmp.eq.s32.totalorder %s26, 0
      %p208 = por %p206, %p207
      %p209 = scmp.le.s32.totalorder 1, %s20
      %p210 = scmp.lt.s32.totalorder %s20, 3
      %p211 = pnand %p209, %p210
      %p212 = pneg %p211
      // Predicated region
      $region9: #{tpu_custom_call.1} parent=5 // pred_check
        _
      $region10: #{tpu_custom_call.1} parent=5 // pred_check_branch
        %214 = sbr.rel (%p211) target = $region12
      $region11: #{tpu_custom_call.1} parent=5 // pred_region
        %s215 = ssub.s32 %s20, 1
        // Predicated region
        $region13: #{tpu_custom_call.1} parent=11 // pred_check
          %p216 = pneg %p79
        $region14: #{tpu_custom_call.1} parent=11 // pred_check_branch
          %218 = sbr.rel (%p216) target = $region16
        $region15: #{tpu_custom_call.1} parent=11 // pred_region
          %220 = vsyncadd [#allocation7], 0
          %s222 = sshll.u32 %s1, 4
          %s223 = int_to_ptr.hbm [resolvable:$true] %s222
          %s224 = sshll.u32 [#allocation6], 4
          %s225 = int_to_ptr.vmem [resolvable:$true] %s224
          %227 = dma.hbm_to_vmem [thread:$0]  %s223, 128, %s225, [#allocation7]
        $region16: #{tpu_custom_call.1} parent=11 // pred_fallthru
          _
        // Predicated region
        $region17: #{tpu_custom_call.1} parent=11 // pred_check
          %p228 = pneg %p100
        $region18: #{tpu_custom_call.1} parent=11 // pred_check_branch
          %230 = sbr.rel (%p228) target = $region20
        $region19: #{tpu_custom_call.1} parent=11 // pred_region
          %232 = vsyncadd [#allocation7], 0
          %s233 = sshll.u32 %s2, 4
          %s234 = int_to_ptr.hbm [resolvable:$true] %s233
          %s235 = sshll.u32 [#allocation8], 4
          %s236 = int_to_ptr.vmem [resolvable:$true] %s235
          %241 = dma.hbm_to_vmem [thread:$0]  %s234, 256, %s236, [#allocation7], 64, 64, 4
        $region20: #{tpu_custom_call.1} parent=11 // pred_fallthru
          _
        // Predicated region
        $region21: #{tpu_custom_call.1} parent=11 // pred_check
          %p242 = pneg %p121
        $region22: #{tpu_custom_call.1} parent=11 // pred_check_branch
          %244 = sbr.rel (%p242) target = $region24
        $region23: #{tpu_custom_call.1} parent=11 // pred_region
          _
        $region24: #{tpu_custom_call.1} parent=11 // pred_fallthru
          _
        // Predicated region
        $region25: #{tpu_custom_call.1} parent=11 // pred_check
          %p245 = pneg %p147
        $region26: #{tpu_custom_call.1} parent=11 // pred_check_branch
          %247 = sbr.rel (%p245) target = $region28
        $region27: #{tpu_custom_call.1} parent=11 // pred_region
          %249 = vsyncadd [#allocation10], 0
          %s250 = smul.addr %s30, 4
          %s251 = scalar_lea.hbm %s4, %s250
          %s252 = sshll.u32 %s251, 4
          %s253 = int_to_ptr.hbm [resolvable:$true] %s252
          %s254 = sshll.u32 [#allocation9], 4
          %s255 = int_to_ptr.vmem [resolvable:$true] %s254
          %260 = dma.hbm_to_vmem [thread:$0]  %s253, 256, %s255, [#allocation10], 64, 64, 4
        $region28: #{tpu_custom_call.1} parent=11 // pred_fallthru
          _
        // Predicated region
        $region29: #{tpu_custom_call.1} parent=11 // pred_check
          %p261 = pneg %p173
        $region30: #{tpu_custom_call.1} parent=11 // pred_check_branch
          %263 = sbr.rel (%p261) target = $region32
        $region31: #{tpu_custom_call.1} parent=11 // pred_region
          %p264 = scmp.lt.s32.totalorder %s30, 0
          %s265 = scalar_select %p264, %s30, 0
          %s266 = scalar_lea.vmem %s5, %s265
        $region32: #{tpu_custom_call.1} parent=11 // pred_fallthru
          _
      $region12: #{tpu_custom_call.1} parent=5 // pred_fallthru
        _
      %p267 = scmp.lt.s32.totalorder %s20, 2
      // Predicated region
      $region33: #{tpu_custom_call.1} parent=5 // pred_check
        %p268 = pneg %p267
      $region34: #{tpu_custom_call.1} parent=5 // pred_check_branch
        %270 = sbr.rel (%p268) target = $region36
      $region35: #{tpu_custom_call.1} parent=5 // pred_region
        // Predicated region
        $region37: #{tpu_custom_call.1} parent=35 // pred_check
          %p271 = pneg %p52
        $region38: #{tpu_custom_call.1} parent=35 // pred_check_branch
          %273 = sbr.rel (%p271) target = $region40
        $region39: #{tpu_custom_call.1} parent=35 // pred_region
          %s274 = sand.u32 %s42, 1
          %s275 = scalar_lea.sflag [#allocation4], %s274
          %s276 = sand.u32 %s42, 1
          %s277 = smul.addr %s276, 8
          %s278 = scalar_lea.vmem [#allocation3], %s277
          %280 = vsyncadd %s275, 0
          %s281 = smul.addr %s27, 8
          %s282 = scalar_lea.hbm %s0, %s281
          %s284 = sshll.u32 %s282, 4
          %s285 = int_to_ptr.hbm [resolvable:$true] %s284
          %s286 = sshll.u32 %s278, 4
          %s287 = int_to_ptr.vmem [resolvable:$true] %s286
          %289 = dma.hbm_to_vmem [thread:$0]  %s285, 128, %s287, %s275
        $region40: #{tpu_custom_call.1} parent=35 // pred_fallthru
          _
      $region36: #{tpu_custom_call.1} parent=5 // pred_fallthru
        _
      %p290 = scmp.le.s32.totalorder 1, %s20
      %p291 = scmp.lt.s32.totalorder %s20, 3
      %p292 = pnand %p290, %p291
      %p293 = pneg %p292
      // Predicated region
      $region41: #{tpu_custom_call.1} parent=5 // pred_check
        _
      $region42: #{tpu_custom_call.1} parent=5 // pred_check_branch
        %295 = sbr.rel (%p292) target = $region44
      $region43: #{tpu_custom_call.1} parent=5 // pred_region
        %s296 = ssub.s32 %s20, 1
        %s297 = sand.u32 %s45, 1
        %s298 = scalar_lea.sflag [#allocation4], %s297
        %s299 = sand.u32 %s45, 1
        %s300 = smul.addr %s299, 8
        %s301 = scalar_lea.vmem [#allocation3], %s300
        // Predicated region
        $region45: #{tpu_custom_call.1} parent=43 // pred_check
          %p302 = pneg %p58
        $region46: #{tpu_custom_call.1} parent=43 // pred_check_branch
          %304 = sbr.rel (%p302) target = $region48
        $region47: #{tpu_custom_call.1} parent=43 // pred_region
          %306 = dma.done %s298, 128
        $region48: #{tpu_custom_call.1} parent=43 // pred_fallthru
          _
        // Predicated region
        $region49: #{tpu_custom_call.1} parent=43 // pred_check
          %p307 = pneg %p79
        $region50: #{tpu_custom_call.1} parent=43 // pred_check_branch
          %309 = sbr.rel (%p307) target = $region52
        $region51: #{tpu_custom_call.1} parent=43 // pred_region
          %311 = dma.done [#allocation7], 128
        $region52: #{tpu_custom_call.1} parent=43 // pred_fallthru
          _
        // Predicated region
        $region53: #{tpu_custom_call.1} parent=43 // pred_check
          %p312 = pneg %p100
        $region54: #{tpu_custom_call.1} parent=43 // pred_check_branch
          %314 = sbr.rel (%p312) target = $region56
        $region55: #{tpu_custom_call.1} parent=43 // pred_region
          %316 = dma.done [#allocation7], 256
        $region56: #{tpu_custom_call.1} parent=43 // pred_fallthru
          _
        // Predicated region
        $region57: #{tpu_custom_call.1} parent=43 // pred_check
          %p317 = pneg %p147
        $region58: #{tpu_custom_call.1} parent=43 // pred_check_branch
          %319 = sbr.rel (%p317) target = $region60
        $region59: #{tpu_custom_call.1} parent=43 // pred_region
          %321 = dma.done [#allocation10], 256
        $region60: #{tpu_custom_call.1} parent=43 // pred_fallthru
          _
        %s322 = sand.u32 %s45, 1
        %s323 = scalar_lea.sflag [#allocation4], %s322
        %s324 = sand.u32 %s45, 1
        %s325 = smul.addr %s324, 8
        %s326 = scalar_lea.vmem [#allocation3], %s325
        %p327 = pneg %p58
        %p328 = pneg %p55
        %p329 = pneg %p79
        %p330 = pneg %p76
        %p331 = pneg %p100
        %p332 = pneg %p97
        %p333 = pneg %p121
        %p334 = pneg %p118
        %p335 = pneg %p147
        %p336 = pneg %p144
        %p337 = scmp.lt.s32.totalorder %s30, 0
        %s338 = scalar_select %p337, %s30, 0
        %s339 = scalar_lea.vmem %s5, %s338
        %p340 = pneg %p173
        %p341 = pneg %p170
        %p342 = pneg %p201
        %p343 = pneg %p198
        %s344 = sand.u32 %s188, 1
        %s345 = scalar_lea.sflag [#allocation5], %s344
        %s346 = sand.u32 %s188, 1
        %s347 = smul.addr %s346, 8
        %s348 = scalar_lea.vmem [#allocation11], %s347
        %p349 = scmp.lt.s32.totalorder %s30, 0
        %s350 = scalar_select %p349, %s30, 0
        %s351 = scalar_lea.vmem %s5, %s350
        %p353 = scmp.eq.s32.totalorder %s30, 0
        // Predicated region
        $region61: #{tpu_custom_call.1} parent=43 // pred_check
          %p354 = pneg %p353
        $region62: #{tpu_custom_call.1} parent=43 // pred_check_branch
          %356 = sbr.rel (%p354) target = $region64
        $region63: #{tpu_custom_call.1} parent=43 // pred_region
          %v357 = vld [vmem:[%s301] sm:$0xff]
          %v358 = vmul.f32 %v357, %v357
          %vm359 = vcmask 261120
          %v360 = vsel %vm359, %v358, 0.0
          %361 = vadd.xlane.f32.xlu0 %v360
          %v362 = vpop.xlane.xlu0 %361
          %v363 = vrot.slane %v362, 4
          %v364 = vadd.f32 %v362, %v363
          %v365 = vrot.slane %v364, 2
          %v366 = vadd.f32 %v364, %v365
          %v367 = vrot.slane %v366, 1
          %v368 = vadd.f32 %v366, %v367
          %v369 = vrcp.pop 256.0
          %v370 = vmul.f32 256.0, %v369
          %v371 = vsub.f32 1.0, %v370
          %v372 = vmul.f32 %v369, %v371
          %v373 = vadd.f32 %v369, %v372
          %vm374 = vweird.f32 %v369
          %v375 = vsel %vm374, %v369, %v373
          %v376 = vmul.f32 %v368, %v375
          %v377 = vadd.f32 %v376, 1e-08
          %v378 = vrsqrt.pop %v377
          %v379 = vmul.f32 %v378, %v377
          %v380 = vmul.f32 %v379, %v378
          %v381 = vmul.f32 0.5, %v380
          %v382 = vsub.f32 1.5, %v381
          %v383 = vmul.f32 %v378, %v382
          %vm384 = vweird.f32 %v377
          %vm385 = vweird.f32 %v378
          %vm386 = vmor %vm384, %vm385
          %v387 = vsel %vm386, %v378, %v383
          %v388 = vmul.f32 %v357, %v387
          %v389 = vld [vmem:[#allocation6] sm:$0xff]
          %v390 = vmul.f32 %v388, %v389
          %v391 = vpack.c.bf16 %v390, %v390
          %v392 = vld [vmem:[#allocation8] sm:$0xf]
          %v393 = vld [vmem:[#allocation8 + $0x4] sm:$0xf]
          %v394 = vld [vmem:[#allocation8 + $0x8] sm:$0xf]
          %v395 = vld [vmem:[#allocation8 + $0xc] sm:$0xf]
          %v396 = vld [vmem:[%s3] sm:$0x1]
          %v398 = vperm.slane %v396, 0
          %v404 = vunpack.c.l.b16 %v392
          %v405 = vunpack.c.l.b16 %v393
          %v406 = vunpack.c.l.b16 %v394
          %v407 = vunpack.c.l.b16 %v395
          %v408 = vpack.c.b16 %v405, %v404
          %v409 = vpack.c.b16 %v407, %v406
          %v413 = vsel %vm359, %v391, 0
          %415 = vmatpush.bf16.msra.mxu0 0
          %416 = vmatpush.bf16.msra.mxu0 0
          %417 = vmatpush.bf16.msra.mxu0 0
          %418 = vmatpush.bf16.msra.mxu0 0
          %419 = vmatpush.bf16.msra.mxu0 0
          %420 = vmatpush.bf16.msra.mxu0 0
          %421 = vmatpush.bf16.msra.mxu0 %v409
          %422 = vmatpush.bf16.msra.mxu0 %v408
          %423 = vmatmul.bf16.gmra.mxu0 %v413
          %v424 = vpop.f32.mrf.mxu0
          %v425 = vadd.f32 %v398, %v424
          %v426 = vpop.f32.mrf.mxu0
          %427 = vdwg.mxu0
          %v428 = vmax.f32 %v425, 0.0
          %v429 = vpack.c.bf16 %v428, %v428
          %vm430 = vcmask 257024
          %431 = vst.msk [vmem:[#allocation2] sm:$0xf] %vm430, %v429
        $region64: #{tpu_custom_call.1} parent=43 // pred_fallthru
          _
        %v432 = vld [vmem:[#allocation2] sm:$0xf]
        %v433 = vld [vmem:[#allocation9] sm:$0xf]
        %v434 = vld [vmem:[#allocation9 + $0x4] sm:$0xf]
        %v435 = vld [vmem:[#allocation9 + $0x8] sm:$0xf]
        %v436 = vld [vmem:[#allocation9 + $0xc] sm:$0xf]
        %v437 = vld [vmem:[%s351] sm:$0x1]
        %v439 = vperm.slane %v437, 0
        %v445 = vunpack.c.l.b16 %v433
        %v446 = vunpack.c.l.b16 %v434
        %v447 = vunpack.c.l.b16 %v435
        %v448 = vunpack.c.l.b16 %v436
        %v449 = vpack.c.b16 %v446, %v445
        %v450 = vpack.c.b16 %v448, %v447
        %vm453 = vcmask 261120
        %v455 = vsel %vm453, %v432, 0
        %457 = vmatpush.bf16.msra.mxu0 0
        %458 = vmatpush.bf16.msra.mxu0 0
        %459 = vmatpush.bf16.msra.mxu0 0
        %460 = vmatpush.bf16.msra.mxu0 0
        %461 = vmatpush.bf16.msra.mxu0 0
        %462 = vmatpush.bf16.msra.mxu0 0
        %463 = vmatpush.bf16.msra.mxu0 %v450
        %464 = vmatpush.bf16.msra.mxu0 %v449
        %465 = vmatmul.bf16.gmra.mxu0 %v455
        %v466 = vpop.f32.mrf.mxu0
        %v467 = vadd.f32 %v439, %v466
        %v468 = vpop.f32.mrf.mxu0
        %469 = vdwg.mxu0
        %vm470 = vcmask 523264
        %471 = vst.msk [vmem:[%s348] sm:$0xff] %vm470, %v467
        %s472 = sand.u32 %s188, 1
        %s473 = scalar_lea.sflag [#allocation5], %s472
        %s474 = sand.u32 %s188, 1
        %s475 = smul.addr %s474, 8
        %s476 = scalar_lea.vmem [#allocation11], %s475
        // Predicated region
        $region65: #{tpu_custom_call.1} parent=43 // pred_check
          %p477 = pneg %p198
        $region66: #{tpu_custom_call.1} parent=43 // pred_check_branch
          %479 = sbr.rel (%p477) target = $region68
        $region67: #{tpu_custom_call.1} parent=43 // pred_region
          %481 = vsyncadd %s473, 0
          %s482 = sadd.s32 %s30, %s29
          %s483 = smul.addr %s482, 8
          %s484 = scalar_lea.hbm %s6, %s483
          %s486 = sshll.u32 %s476, 4
          %s487 = int_to_ptr.vmem [resolvable:$true] %s486
          %s488 = sshll.u32 %s484, 4
          %s489 = int_to_ptr.hbm [resolvable:$true] %s488
          %491 = dma.vmem_to_hbm [thread:$0]  %s487, 128, %s489, %s473
        $region68: #{tpu_custom_call.1} parent=43 // pred_fallthru
          _
      $region44: #{tpu_custom_call.1} parent=5 // pred_fallthru
        _
      %p492 = scmp.le.s32.totalorder 2, %s20
      // Predicated region
      $region69: #{tpu_custom_call.1} parent=5 // pred_check
        %p493 = pneg %p492
      $region70: #{tpu_custom_call.1} parent=5 // pred_check_branch
        %495 = sbr.rel (%p493) target = $region72
      $region71: #{tpu_custom_call.1} parent=5 // pred_region
        %s496 = ssub.s32 %s20, 2
        // Predicated region
        $region73: #{tpu_custom_call.1} parent=71 // pred_check
          %p497 = pneg %p204
        $region74: #{tpu_custom_call.1} parent=71 // pred_check_branch
          %499 = sbr.rel (%p497) target = $region76
        $region75: #{tpu_custom_call.1} parent=71 // pred_region
          %s500 = sand.u32 %s189, 1
          %s501 = scalar_lea.sflag [#allocation5], %s500
          %s502 = sand.u32 %s189, 1
          %s503 = smul.addr %s502, 8
          %s504 = scalar_lea.vmem [#allocation11], %s503
          %506 = dma.done %s501, 128
        $region76: #{tpu_custom_call.1} parent=71 // pred_fallthru
          _
      $region72: #{tpu_custom_call.1} parent=5 // pred_fallthru
        _
    $region6: #{tpu_custom_call.1} parent=1 // loop_footer
      %s24 = sadd.s32 1, %s20
    $region7: #{tpu_custom_call.1} parent=1 // loop_footer_branch
      %19 = sbr.rel target = $region3
    $region8: #{tpu_custom_call.1} parent=1 // loop_exit
      _
    %507 = vsyncpa [#allocation4], 1
    %s508 = scalar_lea.sflag [#allocation4], 1
    %509 = vsyncpa %s508, 1
    %510 = vsyncpa [#allocation7], 1
    %511 = vsyncpa [#allocation10], 1
    %512 = vsyncpa [#allocation5], 1
    %s513 = scalar_lea.sflag [#allocation5], 1
    %514 = vsyncpa %s513, 1

</llo_original>
